<compile_context>
chip_gen: v7x
topology: tpu7x:2x2x1
jax: 0.10.0
libtpu: 0.0.40
codegen_flags: <defaults>
</compile_context>

<pallas_src>
import functools

import jax
import jax.numpy as jnp
from jax.experimental import pallas as pl
from jax.experimental.pallas import tpu as pltpu


def _conv2d_kernel(x_ref, w_ref, o_ref):
    # x_ref: (N*Ho, Kpad)       im2col LHS (KH, Wp, Cin folded on K, zero-padded)
    # w_ref: (Kpad, Wo*Cout)    banded weight slab (KW taps + W-stride folded in)
    # o_ref: (N*Ho, Wo*Cout)    lane-dense output slab
    o_ref[...] = jnp.dot(
        x_ref[...], w_ref[...], preferred_element_type=jnp.float32
    ).astype(o_ref.dtype)


def repack_conv_weights(w_oihw, h, w, stride):
    """One-time ("module init") repack of OIHW conv weights into a banded
    (Toeplitz-in-W) matmul weight of shape (Kpad, Wo*Cout), where
    K = KH*Wp*Cin is zero-padded up to a multiple of 128."""
    cout, cin, kh, kw = w_oihw.shape
    pad_h = (kh - 1) // 2
    pad_w = (kw - 1) // 2
    hp, wp = h + 2 * pad_h, w + 2 * pad_w
    wo = (wp - kw) // stride + 1

    w_hwio = jnp.transpose(w_oihw, (2, 3, 1, 0))                   # (KH, KW, Cin, Cout)
    p = jnp.arange(wp)                                             # padded input col
    kk = jnp.arange(kw)                                            # kernel col tap
    q = jnp.arange(wo)                                             # output col
    sel = (p[:, None, None] ==
           (q[None, None, :] * stride + kk[None, :, None])).astype(w_oihw.dtype)
    # w_big[h, p, i, q, o] = sum_k sel[p, k, q] * w_hwio[h, k, i, o]
    w_big = jnp.einsum("pkq,hkio->hpiqo", sel, w_hwio)
    w_big = w_big.reshape(kh * wp * cin, wo * cout)                # (K, Wo*Cout)

    k_dim = kh * wp * cin
    k_pad = ((k_dim + 127) // 128) * 128                           # 216 -> 256
    w_big = jnp.pad(w_big, ((0, k_pad - k_dim), (0, 0)))
    return w_big                                                   # (Kpad, Wo*Cout)


@functools.partial(jax.jit, static_argnames=("kh", "kw", "stride"))
def conv2d_pallas(x_nchw, w_packed, *, kh, kw, stride=1):
    """Bias-free 2D conv, padding=(k-1)//2, matching nn.Conv2d in module C.
    `w_packed` is the precomputed output of repack_conv_weights."""
    n, cin, h, w = x_nchw.shape
    pad_h = (kh - 1) // 2
    pad_w = (kw - 1) // 2
    hp, wp = h + 2 * pad_h, w + 2 * pad_w
    ho = (hp - kh) // stride + 1
    wo = (wp - kw) // stride + 1

    k_dim = kh * wp * cin
    k_pad = w_packed.shape[0]
    cout = w_packed.shape[1] // wo

    # ---- layout plumbing (plain JAX; fusable into the pallas_call operand) ----
    x_nhwc = jnp.transpose(x_nchw, (0, 2, 3, 1))                   # NCHW -> NHWC
    x_pad = jnp.pad(x_nhwc, ((0, 0), (pad_h, pad_h), (pad_w, pad_w), (0, 0)))
    # im2col over H, with the H-stride absorbed here (contiguous slices only).
    taps = [
        x_pad[:, k : k + (ho - 1) * stride + 1 : stride]           # (N, Ho, Wp, Cin)
        for k in range(kh)
    ]
    x_rows = jnp.stack(taps, axis=2)                               # (N, Ho, KH, Wp, Cin)
    lhs = x_rows.reshape(n * ho, k_dim)
    lhs = jnp.pad(lhs, ((0, 0), (0, k_pad - k_dim)))               # K 216 -> 256

    out_slab = pl.pallas_call(
        _conv2d_kernel,
        out_shape=jax.ShapeDtypeStruct((n * ho, wo * cout), x_nchw.dtype),
        compiler_params=pltpu.CompilerParams(
            allow_input_fusion=[True, False],   # fuse activation plumbing only
        ),
    )(lhs, w_packed)                                               # (N*Ho, Wo*Cout)

    out_nhwc = out_slab.reshape(n, ho, wo, cout)
    return jnp.transpose(out_nhwc, (0, 3, 1, 2))                   # NHWC -> NCHW


if __name__ == "__main__":
    # Module config: C(nIn=4, nOut=8, kSize=3, stride=1)
    nIn, nOut, kSize, stride = 4, 8, 3, 1
    N, H, W = 2, 16, 16

    key = jax.random.PRNGKey(0)
    kx, kw_ = jax.random.split(key)
    x = jax.random.normal(kx, (N, nIn, H, W), dtype=jnp.float32)
    # Deterministic weight init (kaiming-uniform-ish scale, like nn.Conv2d default).
    fan_in = nIn * kSize * kSize
    bound = (1.0 / fan_in) ** 0.5
    w = jax.random.uniform(
        kw_, (nOut, nIn, kSize, kSize), minval=-bound, maxval=bound,
        dtype=jnp.float32,
    )

    # One-time weight repack ("module init"), outside the forward path.
    w_packed = jax.block_until_ready(repack_conv_weights(w, H, W, stride))

    out = conv2d_pallas(x, w_packed, kh=kSize, kw=kSize, stride=stride)
    out = jax.block_until_ready(out)

    # Reference check against XLA's conv (NCHW / OIHW, same padding rule).
    pad = (kSize - 1) // 2
    ref = jax.lax.conv_general_dilated(
        x, w, window_strides=(stride, stride),
        padding=((pad, pad), (pad, pad)),
        dimension_numbers=("NCHW", "OIHW", "NCHW"),
    )
    assert out.shape == ref.shape
    assert jnp.allclose(out, ref, atol=1e-4, rtol=1e-4)

    print("KERNEL_OK")
</pallas_src>

<mosaic_0001>
module attributes {stable_mosaic.version = 11 : i64} {
  func.func @_conv2d_kernel(%arg0: memref<32x256xf32, #tpu.memory_space<vmem>>, %arg1: memref<256x128xf32, #tpu.memory_space<vmem>>, %arg2: memref<32x128xf32, #tpu.memory_space<vmem>>) attributes {dimension_semantics = [], scalar_prefetch = 0 : i64, scratch_operands = 0 : i64, tpu.core_type = #tpu.core_type<tc>} {
    %c0 = arith.constant 0 : index
    %c0_0 = arith.constant 0 : index
    %0 = vector.load %arg0[%c0, %c0_0] : memref<32x256xf32, #tpu.memory_space<vmem>>, vector<32x256xf32>
    %c0_1 = arith.constant 0 : index
    %c0_2 = arith.constant 0 : index
    %1 = vector.load %arg1[%c0_1, %c0_2] : memref<256x128xf32, #tpu.memory_space<vmem>>, vector<256x128xf32>
    %cst = arith.constant dense<0.000000e+00> : vector<32x128xf32>
    %2 = tpu.matmul %0, %1, %cst {dimension_numbers = #tpu.dot_dimension_numbers<[1], [0], [0], [1], [0, 0, 1, 1], [], []>} : vector<32x256xf32>, vector<256x128xf32>, vector<32x128xf32> -> vector<32x128xf32>
    %c0_3 = arith.constant 0 : index
    %c0_4 = arith.constant 0 : index
    %3 = vector.load %arg2[%c0_3, %c0_4] : memref<32x128xf32, #tpu.memory_space<vmem>>, vector<32x128xf32>
    tpu.vector_store %arg2[%c0_3, %c0_4], %2 {strides = array<i32>} : memref<32x128xf32, #tpu.memory_space<vmem>>, vector<32x128xf32>,
    return
  }
}

</mosaic_0001>

<llo_original>
// kernel: conv2d_pallas.2
$region0: #{conv2d_pallas.2}
  #allocation0 [shape = 'u32[]', space=smem, size = 0x4, offset = 0x4, fixed_abs, tag = 'smem constant byte address 0x4 - core index']
  #allocation1 [shape = 'u32[144,128]{1,0:T(1,128)}', space=vmem, size = 0x12000, scoped, tag = 'internal scratch']
  #allocation2 [shape = 'u32[2048]{0}', space=vmem, size = 0x2000, scoped, tag = 'scoped memory for conv2d_pallas.2']
  #allocation3 [shape = 'u32[2048]{0}', space=vmem, size = 0x2000, scoped, tag = 'scoped memory for conv2d_pallas.2']
  #allocation4 [shape = 'u32[2048]{0}', space=vmem, size = 0x2000, scoped, tag = 'scoped memory for conv2d_pallas.2']
  #allocation5 [shape = 'u32[2048]{0}', space=vmem, size = 0x2000, scoped, tag = 'scoped memory for conv2d_pallas.2']
  #allocation6 [shape = 'u32[2048]{0}', space=vmem, size = 0x2000, scoped, tag = 'scoped memory for conv2d_pallas.2']
  %s0 = inlined_call_operand.vmem [shape: f32[256,128], index: 0, kind: input, shape index: {}]
  %s1 = inlined_call_operand.vmem [shape: f32[32,216], index: 1, kind: input, shape index: {}]
  %s2 = inlined_call_operand.<no memory space> [shape: f32[], index: 2, kind: input, shape index: {}]
  %s3 = inlined_call_operand.vmem [shape: f32[32,128], index: 3, kind: output, shape index: {}]
  %s4 = sld [smem:[#allocation0]]
  $region18: #{conv2d_pallas.2} parent=0
    _
  %s6 = ssub.s32 1, %s4
  %s7 = scalar_select 0, %s6, %s4
  %v8 = vstv %s2
  $region1: #{conv2d_pallas.2} parent=0
    #allocation7 [shape = 'u8[32768]{0}', space=vmem, size = 0x8000, dematerialized = true, scoped, tag = 'FusionAdapter Buffer %fusion.4 = f32[32,256]{1,0:T(8,128)} fusion(%param_1.13, %param_2.3), kind=kLoop, calls=%fused_computation.8.clone, metadata={op_name="jit(conv2d_pallas)/jit(_pad)/pad" stack_frame_id=12}']
    // Predicated region
    $region2: #{conv2d_pallas.2} parent=1 // pred_check
      _
    $region3: #{conv2d_pallas.2} parent=1 // pred_check_branch
      %10 = sbr.rel (0) target = $region5
    $region4: #{conv2d_pallas.2} parent=1 // pred_region
      _
    $region5: #{conv2d_pallas.2} parent=1 // pred_fallthru
      _
    // Predicated region
    $region6: #{conv2d_pallas.2} parent=1 // pred_check
      _
    $region7: #{conv2d_pallas.2} parent=1 // pred_check_branch
      %12 = sbr.rel (0) target = $region9
    $region8: #{conv2d_pallas.2} parent=1 // pred_region
      _
    $region9: #{conv2d_pallas.2} parent=1 // pred_fallthru
      _
    %v13 = vld [vmem:[%s1] sm:$0xff]
    %v14 = vlaneseq
    %v15 = vand.u32 %v14, 127
    %vm17 = vcmp.lt.s32.totalorder %v15, 216
    %v18 = vsel %vm17, %v13, %v8
    %20 = vst [vmem:[#allocation7] sm:$0xff] %v18
    %s21 = scalar_lea.vmem %s1, 8
    %v22 = vld [vmem:[%s21] sm:$0xff]
    %v23 = vlaneseq
    %v24 = vand.u32 %v23, 127
    %v25 = vadd.s32 %v24, 128
    %vm26 = vcmp.lt.s32.totalorder %v25, 216
    %v27 = vsel %vm26, %v22, %v8
    %s28 = scalar_lea.vmem [#allocation7], 8
    %30 = vst [vmem:[%s28] sm:$0xff] %v27
    %s31 = scalar_lea.vmem %s1, 16
    %v32 = vld [vmem:[%s31] sm:$0xff]
    %v33 = vlaneseq
    %v34 = vand.u32 %v33, 127
    %vm36 = vcmp.lt.s32.totalorder %v34, 216
    %v37 = vsel %vm36, %v32, %v8
    %s38 = scalar_lea.vmem [#allocation7], 16
    %40 = vst [vmem:[%s38] sm:$0xff] %v37
    %s41 = scalar_lea.vmem %s1, 24
    %v42 = vld [vmem:[%s41] sm:$0xff]
    %v43 = vlaneseq
    %v44 = vand.u32 %v43, 127
    %v45 = vadd.s32 %v44, 128
    %vm46 = vcmp.lt.s32.totalorder %v45, 216
    %v47 = vsel %vm46, %v42, %v8
    %s48 = scalar_lea.vmem [#allocation7], 24
    %50 = vst [vmem:[%s48] sm:$0xff] %v47
    %s51 = scalar_lea.vmem %s1, 32
    %v52 = vld [vmem:[%s51] sm:$0xff]
    %v53 = vlaneseq
    %v54 = vand.u32 %v53, 127
    %vm56 = vcmp.lt.s32.totalorder %v54, 216
    %v57 = vsel %vm56, %v52, %v8
    %s58 = scalar_lea.vmem [#allocation7], 32
    %60 = vst [vmem:[%s58] sm:$0xff] %v57
    %s61 = scalar_lea.vmem %s1, 40
    %v62 = vld [vmem:[%s61] sm:$0xff]
    %v63 = vlaneseq
    %v64 = vand.u32 %v63, 127
    %v65 = vadd.s32 %v64, 128
    %vm66 = vcmp.lt.s32.totalorder %v65, 216
    %v67 = vsel %vm66, %v62, %v8
    %s68 = scalar_lea.vmem [#allocation7], 40
    %70 = vst [vmem:[%s68] sm:$0xff] %v67
    %s71 = scalar_lea.vmem %s1, 48
    %v72 = vld [vmem:[%s71] sm:$0xff]
    %v73 = vlaneseq
    %v74 = vand.u32 %v73, 127
    %vm76 = vcmp.lt.s32.totalorder %v74, 216
    %v77 = vsel %vm76, %v72, %v8
    %s78 = scalar_lea.vmem [#allocation7], 48
    %80 = vst [vmem:[%s78] sm:$0xff] %v77
    %s81 = scalar_lea.vmem %s1, 56
    %v82 = vld [vmem:[%s81] sm:$0xff]
    %v83 = vlaneseq
    %v84 = vand.u32 %v83, 127
    %v85 = vadd.s32 %v84, 128
    %vm86 = vcmp.lt.s32.totalorder %v85, 216
    %v87 = vsel %vm86, %v82, %v8
    %s88 = scalar_lea.vmem [#allocation7], 56
    %90 = vst [vmem:[%s88] sm:$0xff] %v87
    %v91 = vld [vmem:[#allocation7] sm:$0xff]
    %v92 = vld [vmem:[#allocation7 + $0x8] sm:$0xff]
    %v93 = vld [vmem:[#allocation7 + $0x10] sm:$0xff]
    %v94 = vld [vmem:[#allocation7 + $0x18] sm:$0xff]
    %v95 = vld [vmem:[#allocation7 + $0x20] sm:$0xff]
    %v96 = vld [vmem:[#allocation7 + $0x28] sm:$0xff]
    %v97 = vld [vmem:[#allocation7 + $0x30] sm:$0xff]
    %v98 = vld [vmem:[#allocation7 + $0x38] sm:$0xff]
    %v99 = vld [vmem:[%s0] sm:$0xff]
    %v100 = vld [vmem:[%s0 + $0x8] sm:$0xff]
    %v101 = vld [vmem:[%s0 + $0x10] sm:$0xff]
    %v102 = vld [vmem:[%s0 + $0x18] sm:$0xff]
    %v103 = vld [vmem:[%s0 + $0x20] sm:$0xff]
    %v104 = vld [vmem:[%s0 + $0x28] sm:$0xff]
    %v105 = vld [vmem:[%s0 + $0x30] sm:$0xff]
    %v106 = vld [vmem:[%s0 + $0x38] sm:$0xff]
    %v107 = vld [vmem:[%s0 + $0x40] sm:$0xff]
    %v108 = vld [vmem:[%s0 + $0x48] sm:$0xff]
    %v109 = vld [vmem:[%s0 + $0x50] sm:$0xff]
    %v110 = vld [vmem:[%s0 + $0x58] sm:$0xff]
    %v111 = vld [vmem:[%s0 + $0x60] sm:$0xff]
    %v112 = vld [vmem:[%s0 + $0x68] sm:$0xff]
    %v113 = vld [vmem:[%s0 + $0x70] sm:$0xff]
    %v114 = vld [vmem:[%s0 + $0x78] sm:$0xff]
    %v115 = vld [vmem:[%s0 + $0x80] sm:$0xff]
    %v116 = vld [vmem:[%s0 + $0x88] sm:$0xff]
    %v117 = vld [vmem:[%s0 + $0x90] sm:$0xff]
    %v118 = vld [vmem:[%s0 + $0x98] sm:$0xff]
    %v119 = vld [vmem:[%s0 + $0xa0] sm:$0xff]
    %v120 = vld [vmem:[%s0 + $0xa8] sm:$0xff]
    %v121 = vld [vmem:[%s0 + $0xb0] sm:$0xff]
    %v122 = vld [vmem:[%s0 + $0xb8] sm:$0xff]
    %v123 = vld [vmem:[%s0 + $0xc0] sm:$0xff]
    %v124 = vld [vmem:[%s0 + $0xc8] sm:$0xff]
    %v125 = vld [vmem:[%s0 + $0xd0] sm:$0xff]
    %v126 = vld [vmem:[%s0 + $0xd8] sm:$0xff]
    %v127 = vld [vmem:[%s0 + $0xe0] sm:$0xff]
    %v128 = vld [vmem:[%s0 + $0xe8] sm:$0xff]
    %v129 = vld [vmem:[%s0 + $0xf0] sm:$0xff]
    %v130 = vld [vmem:[%s0 + $0xf8] sm:$0xff]
    %131 = vmatprep.subr.mxu0 0.0
    %132 = vmatpush1.msra.mxu0 %v99
    %133 = vmatprep.subr.mxu0 0.0
    %134 = vmatpush1.msra.mxu0 %v100
    %135 = vmatprep.subr.mxu0 0.0
    %136 = vmatpush1.msra.mxu0 %v101
    %137 = vmatprep.subr.mxu0 0.0
    %138 = vmatpush1.msra.mxu0 %v102
    %139 = vmatprep.subr.mxu0 0.0
    %140 = vmatpush1.msra.mxu0 %v103
    %141 = vmatprep.subr.mxu0 0.0
    %142 = vmatpush1.msra.mxu0 %v104
    %143 = vmatprep.subr.mxu0 0.0
    %144 = vmatpush1.msra.mxu0 %v105
    %145 = vmatprep.subr.mxu0 0.0
    %146 = vmatpush1.msra.mxu0 %v106
    %147 = vmatprep.subr.mxu0 0.0
    %148 = vmatpush1.msra.mxu0 %v107
    %149 = vmatprep.subr.mxu0 0.0
    %150 = vmatpush1.msra.mxu0 %v108
    %151 = vmatprep.subr.mxu0 0.0
    %152 = vmatpush1.msra.mxu0 %v109
    %153 = vmatprep.subr.mxu0 0.0
    %154 = vmatpush1.msra.mxu0 %v110
    %155 = vmatprep.subr.mxu0 0.0
    %156 = vmatpush1.msra.mxu0 %v111
    %157 = vmatprep.subr.mxu0 0.0
    %158 = vmatpush1.msra.mxu0 %v112
    %159 = vmatprep.subr.mxu0 0.0
    %160 = vmatpush1.msra.mxu0 %v113
    %161 = vmatprep.subr.mxu0 0.0
    %162 = vmatpush1.msra.mxu0 %v114
    %163 = vmatprep.subr.mxu0 0.0
    %164 = vmatpush1.msra.mxu0 %v115
    %165 = vmatprep.subr.mxu0 0.0
    %166 = vmatpush1.msra.mxu0 %v116
    %167 = vmatprep.subr.mxu0 0.0
    %168 = vmatpush1.msra.mxu0 %v117
    %169 = vmatprep.subr.mxu0 0.0
    %170 = vmatpush1.msra.mxu0 %v118
    %171 = vmatprep.subr.mxu0 0.0
    %172 = vmatpush1.msra.mxu0 %v119
    %173 = vmatprep.subr.mxu0 0.0
    %174 = vmatpush1.msra.mxu0 %v120
    %175 = vmatprep.subr.mxu0 0.0
    %176 = vmatpush1.msra.mxu0 %v121
    %177 = vmatprep.subr.mxu0 0.0
    %178 = vmatpush1.msra.mxu0 %v122
    %179 = vmatprep.subr.mxu0 0.0
    %180 = vmatpush1.msra.mxu0 %v123
    %181 = vmatprep.subr.mxu0 0.0
    %182 = vmatpush1.msra.mxu0 %v124
    %183 = vmatprep.subr.mxu0 0.0
    %184 = vmatpush1.msra.mxu0 %v125
    %185 = vmatprep.subr.mxu0 0.0
    %186 = vmatpush1.msra.mxu0 %v126
    %187 = vmatprep.subr.mxu0 0.0
    %188 = vmatpush1.msra.mxu0 %v127
    %189 = vmatprep.subr.mxu0 0.0
    %190 = vmatpush1.msra.mxu0 %v128
    %191 = vmatprep.subr.mxu0 0.0
    %192 = vmatpush1.msra.mxu0 %v129
    %193 = vmatprep.subr.mxu0 0.0
    %194 = vmatpush1.msra.mxu0 %v130
    %195 = vmatprep.mubr.f32.mxu0 %v92
    %196 = vmatmul.mubr.f32.gmra.mrb[0].mxu0 %v91
    %v197 = vpop.f32.mrb[0].mxu0
    %v198 = vadd.f32 0.0, %v197
    %v199 = vpop.f32.mrb[0].mxu0
    %200 = vmatprep.mubr.f32.mxu0 %v94
    %201 = vmatmul.mubr.f32.gmra.mrb[0].mxu0 %v93
    %v202 = vpop.f32.mrb[0].mxu0
    %v203 = vadd.f32 0.0, %v202
    %v204 = vpop.f32.mrb[0].mxu0
    %205 = vmatprep.mubr.f32.mxu0 %v96
    %206 = vmatmul.mubr.f32.gmra.mrb[0].mxu0 %v95
    %v207 = vpop.f32.mrb[0].mxu0
    %v208 = vadd.f32 0.0, %v207
    %v209 = vpop.f32.mrb[0].mxu0
    %210 = vmatprep.mubr.f32.mxu0 %v98
    %211 = vmatmul.mubr.f32.gmra.mrb[0].mxu0 %v97
    %v212 = vpop.f32.mrb[0].mxu0
    %v213 = vadd.f32 0.0, %v212
    %v214 = vpop.f32.mrb[0].mxu0
    %215 = vdwg.mxu0
    %216 = vst [vmem:[%s3] sm:$0xff] %v198
    %217 = vst [vmem:[%s3 + $0x8] sm:$0xff] %v203
    %218 = vst [vmem:[%s3 + $0x10] sm:$0xff] %v208
    %219 = vst [vmem:[%s3 + $0x18] sm:$0xff] %v213
    // Predicated region
    $region10: #{conv2d_pallas.2} parent=1 // pred_check
      _
    $region11: #{conv2d_pallas.2} parent=1 // pred_check_branch
      %221 = sbr.rel (0) target = $region13
    $region12: #{conv2d_pallas.2} parent=1 // pred_region
      _
    $region13: #{conv2d_pallas.2} parent=1 // pred_fallthru
      _
    // Predicated region
    $region14: #{conv2d_pallas.2} parent=1 // pred_check
      _
    $region15: #{conv2d_pallas.2} parent=1 // pred_check_branch
      %223 = sbr.rel (0) target = $region17
    $region16: #{conv2d_pallas.2} parent=1 // pred_region
      _
    $region17: #{conv2d_pallas.2} parent=1 // pred_fallthru
      _

</llo_original>
